<compile_context>
chip_gen: v6e
topology: v6e:2x2x1
jax: 0.10.0
libtpu: 0.0.40
codegen_flags: <defaults>
</compile_context>

<pallas_src>
import functools

import jax
import jax.numpy as jnp
from jax import lax
from jax.experimental import pallas as pl
from jax.experimental.pallas import tpu as pltpu

LANE = 128  # TPU lane width


def _round_up(x, m):
    return ((x + m - 1) // m) * m


def _round_down(x, m):
    return (x // m) * m


def _pick_tile_rows(n, cap):
    """Largest multiple-of-128 tile <= cap; prefer one that divides n exactly
    (searching down to ~3/4 of cap) so there is no partial tail block."""
    floor = max(LANE, _round_down((3 * cap) // 4, LANE))
    t = cap
    while t >= floor:
        if n % t == 0:
            return t
        t -= LANE
    return cap


def _attn_out_kernel(b_ref, x_ref, w_ref, o_ref, *, precision):
    """One row tile of logits = x @ w + b, contracted on the MXU.

    b_ref: (1,) bias in SMEM.
    x_ref: (tm, hid) row tile in VMEM (software-pipelined over the grid).
    w_ref: (1, hid) lane-dense weight, VMEM-resident across the grid.
    o_ref: (1, tm) lane-dense logits for this tile.
    """
    row = lax.dot_general(
        w_ref[...], x_ref[...],
        dimension_numbers=(((1,), (1,)), ((), ())),   # contract over hid (rhs transposed)
        preferred_element_type=jnp.float32,
        precision=precision,
    )                                                  # (1, tm), f32 accumulate
    o_ref[...] = (row + b_ref[0]).astype(o_ref.dtype)


def attn_out_layer(input_embeds, weight, bias, class_size,
                   *, target_tile_bytes=8 * 1024 * 1024, max_rows=8192):
    """input_embeds: (..., hid); weight: (hid, 1)/(1, hid)/(hid,); bias: (1,).

    Returns logits of shape (-1, class_size), matching Attn_Out_Layer.forward.
    """
    hid = input_embeds.shape[-1]
    x2d = input_embeds.reshape(-1, hid)                 # (N, hid), consumed in place
    n = x2d.shape[0]
    assert (n % class_size) == 0, "total rows must be divisible by class_size"

    dtype = x2d.dtype
    w_row = weight.reshape(1, hid).astype(dtype)        # keep native MXU operand dtype
    b_vec = bias.reshape((1,)).astype(jnp.float32)

    itemsize = jnp.dtype(dtype).itemsize
    hid_vmem = _round_up(hid, LANE)                     # VMEM layout pads lanes to 128

    # Rows per tile: ~target_tile_bytes of VMEM per (double-buffered) x tile.
    if n < LANE:
        tm = n                                          # single full-extent block
    else:
        cap = min(max_rows, n,
                  max(LANE, target_tile_bytes // (hid_vmem * itemsize)))
        cap = max(LANE, _round_down(cap, LANE))
        tm = _pick_tile_rows(n, cap)
    num_tiles = pl.cdiv(n, tm)
    n_out = num_tiles * tm                              # >= n; tail lanes dropped below

    tile_bytes = tm * hid_vmem * itemsize
    # 2x double-buffered x tile + resident weight/outputs + slack; explicit so
    # v5e's 16 MiB scoped default never silently constrains us, and capped well
    # under v7x's 64 MiB/TC physical VMEM.
    vmem_limit = int(min(48 << 20, max(16 << 20, 2 * tile_bytes + (8 << 20))))

    # Full-f32 MXU path for f32 inputs (matches reference); bf16 stays native.
    precision = lax.Precision.HIGHEST if dtype == jnp.float32 else None

    out = pl.pallas_call(
        functools.partial(_attn_out_kernel, precision=precision),
        out_shape=jax.ShapeDtypeStruct((1, n_out), jnp.float32),
        grid_spec=pltpu.PrefetchScalarGridSpec(
            num_scalar_prefetch=0,
            grid=(num_tiles,),
            in_specs=[
                pl.BlockSpec(memory_space=pltpu.SMEM),           # bias (1,)
                pl.BlockSpec((tm, hid), lambda i: (i, 0)),       # x row tile (pipelined)
                pl.BlockSpec((1, hid), lambda i: (0, 0)),        # weight (VMEM-resident)
            ],
            out_specs=pl.BlockSpec((1, tm), lambda i: (0, i)),   # lane-dense logits row
        ),
        compiler_params=pltpu.CompilerParams(
            dimension_semantics=("parallel",),                   # v7x dual-TC friendly
            vmem_limit_bytes=vmem_limit,
        ),
        cost_estimate=pl.CostEstimate(
            flops=2 * n * hid,
            transcendentals=0,
            bytes_accessed=n * hid * itemsize + hid * itemsize + n * 4,
        ),
    )(b_vec, x2d, w_row)

    logits = out[0, :n]                                 # drop any ragged-tail lanes
    return logits.reshape(-1, class_size)


def _reference(x, weight, bias, class_size):
    hid = x.shape[-1]
    x32 = x.reshape(-1, hid).astype(jnp.float32)
    ref = jnp.dot(x32, weight.astype(jnp.float32),
                  precision=lax.Precision.HIGHEST) + bias.astype(jnp.float32)
    return ref.reshape(-1, class_size)


if __name__ == "__main__":
    root = jax.random.PRNGKey(0)

    cases = [
        # (batch, class_size, hid, dtype, tol)
        (2, 4, 32, jnp.float32, 1e-4),      # module-implied small shapes (single block)
        (10, 50, 768, jnp.float32, 1e-4),   # BERT-ish hid; tiled rows + ragged tail
    ]

    for idx, (batch, class_size, hid, dtype, tol) in enumerate(cases):
        k_x, k_w, k_b = jax.random.split(jax.random.fold_in(root, idx), 3)

        # Deterministic "nn.Linear(hid, 1)"-style init: U(-1/sqrt(hid), 1/sqrt(hid))
        bound = 1.0 / (hid ** 0.5)
        weight = jax.random.uniform(k_w, (hid, 1), jnp.float32, -bound, bound)
        bias = jax.random.uniform(k_b, (1,), jnp.float32, -bound, bound)
        input_embeds = jax.random.normal(k_x, (batch, class_size, hid), dtype)

        logits = attn_out_layer(input_embeds, weight, bias, class_size)
        logits = jax.block_until_ready(logits)

        ref = _reference(input_embeds, weight, bias, class_size)
        assert logits.shape == (batch, class_size), f"bad shape {logits.shape}"
        assert jnp.allclose(logits, ref, atol=tol, rtol=tol), \
            f"mismatch vs reference in case {idx}"

    print("KERNEL_OK")
</pallas_src>

<mosaic_0001>
module attributes {stable_mosaic.version = 11 : i64} {
  func.func @_attn_out_kernel(%arg0: i32, %arg1: memref<1xf32, #tpu.memory_space<smem>>, %arg2: memref<8x32xf32, #tpu.memory_space<vmem>>, %arg3: memref<1x32xf32, #tpu.memory_space<vmem>>, %arg4: memref<1x8xf32, #tpu.memory_space<vmem>>) attributes {dimension_semantics = [#tpu.dimension_semantics<parallel>], iteration_bounds = array<i64: 1>, scalar_prefetch = 0 : i64, scratch_operands = 0 : i64, tpu.core_type = #tpu.core_type<tc>, window_params = [{transform_indices = @transform_0, window_bounds = array<i64: 1>}, {transform_indices = @transform_1, window_bounds = array<i64: 8, 32>}, {pipeline_mode = #tpu.pipeline_mode<synchronous>, transform_indices = @transform_2, window_bounds = array<i64: 1, 32>}, {transform_indices = @transform_3, window_bounds = array<i64: 1, 8>}]} {
    %c0 = arith.constant 0 : index
    %c0_0 = arith.constant 0 : index
    %0 = vector.load %arg3[%c0, %c0_0] : memref<1x32xf32, #tpu.memory_space<vmem>>, vector<1x32xf32>
    %c0_1 = arith.constant 0 : index
    %c0_2 = arith.constant 0 : index
    %1 = vector.load %arg2[%c0_1, %c0_2] : memref<8x32xf32, #tpu.memory_space<vmem>>, vector<8x32xf32>
    %cst = arith.constant dense<0.000000e+00> : vector<1x8xf32>
    %2 = tpu.matmul %0, %1, %cst {dimension_numbers = #tpu.dot_dimension_numbers<[1], [1], [0], [0], [0, 0, 1, 0], [], []>, precision = #tpu.contract_precision<fp32>} : vector<1x32xf32>, vector<8x32xf32>, vector<1x8xf32> -> vector<1x8xf32>
    %c0_3 = arith.constant 0 : index
    %3 = memref.load %arg1[%c0_3] : memref<1xf32, #tpu.memory_space<smem>>
    %4 = vector.broadcast %3 : f32 to vector<1x8xf32>
    %5 = arith.addf %2, %4 : vector<1x8xf32>
    %c0_4 = arith.constant 0 : index
    %c0_5 = arith.constant 0 : index
    %6 = vector.load %arg4[%c0_4, %c0_5] : memref<1x8xf32, #tpu.memory_space<vmem>>, vector<1x8xf32>
    tpu.vector_store %arg4[%c0_4, %c0_5], %5 {strides = array<i32>} : memref<1x8xf32, #tpu.memory_space<vmem>>, vector<1x8xf32>,
    return
  }
  func.func @transform_0(%arg0: i32) -> i32 {
    %c0_i32 = arith.constant 0 : i32
    %c0_i32_0 = arith.constant 0 : i32
    return %c0_i32 : i32
  }
  func.func @transform_1(%arg0: i32) -> (i32, i32) {
    %c0_i32 = arith.constant 0 : i32
    %c0_i32_0 = arith.constant 0 : i32
    return %arg0, %c0_i32 : i32, i32
  }
  func.func @transform_2(%arg0: i32) -> (i32, i32) {
    %c0_i32 = arith.constant 0 : i32
    %c0_i32_0 = arith.constant 0 : i32
    %c0_i32_1 = arith.constant 0 : i32
    return %c0_i32, %c0_i32_0 : i32, i32
  }
  func.func @transform_3(%arg0: i32) -> (i32, i32) {
    %c0_i32 = arith.constant 0 : i32
    %c0_i32_0 = arith.constant 0 : i32
    return %c0_i32, %arg0 : i32, i32
  }
}

</mosaic_0001>

<llo_original>
// kernel: tpu_custom_call.1
$region0: #{tpu_custom_call.1}
  #allocation0 [shape = 'u32[]', space=smem, size = 0x4, offset = 0x4, fixed_abs, tag = 'smem constant byte address 0x4 - core index']
  #allocation1 [shape = 'u32[144,128]{1,0:T(1,128)}', space=vmem, size = 0x12000, scoped, tag = 'internal scratch']
  #allocation2 [shape = 'f32[1]{0:T(128)S(6)}', space=smem, size = 0x200, scoped, tag = 'scoped memory for tpu_custom_call.1']
  %s0 = inlined_call_operand.<no memory space> [shape: f32[1], index: 0, kind: input, shape index: {}]
  %s1 = inlined_call_operand.hbm [shape: f32[8,32], index: 1, kind: input, shape index: {}]
  %s2 = inlined_call_operand.vmem [shape: f32[1,32], index: 2, kind: input, shape index: {}]
  %s3 = inlined_call_operand.hbm [shape: f32[1,8], index: 3, kind: output, shape index: {}]
  %s4 = sld [smem:[#allocation0]]
  $region26: #{tpu_custom_call.1} parent=0
    _
  %s6 = ssub.s32 1, %s4
  %s7 = scalar_select 0, %s6, %s4
  %8 = sst [smem:[#allocation2]] %s0
  $region1: #{tpu_custom_call.1} parent=0
    #allocation3 [shape = 'u8[4096]{0}', space=vmem, size = 0x1000, scoped, tag = 'input window, operand 1, single buffered']
    #allocation4 [shape = 's32[1]{0}', space=sflag, size = 0x4, scoped, tag = 'scoped memory for tpu_custom_call.1']
    #allocation5 [shape = 's32[1]{0}', space=sflag, size = 0x4, scoped, tag = 'scoped memory for tpu_custom_call.1']
    #allocation6 [shape = 'u8[512]{0}', space=vmem, size = 0x400, scoped, tag = 'output window, operand 0, single buffered']
    %9 = vsyncpa [#allocation4], 0
    %10 = vsyncpa [#allocation5], 0
    // Predicated region
    $region2: #{tpu_custom_call.1} parent=1 // pred_check
      _
    $region3: #{tpu_custom_call.1} parent=1 // pred_check_branch
      %12 = sbr.rel (0) target = $region5
    $region4: #{tpu_custom_call.1} parent=1 // pred_region
      _
    $region5: #{tpu_custom_call.1} parent=1 // pred_fallthru
      _
    // Predicated region
    $region6: #{tpu_custom_call.1} parent=1 // pred_check
      _
    $region7: #{tpu_custom_call.1} parent=1 // pred_check_branch
      %14 = sbr.rel (0) target = $region9
    $region8: #{tpu_custom_call.1} parent=1 // pred_region
      %s16 = ssub.s32 128, 128
      %17 = vsyncadd [#allocation4], %s16
      %s19 = sshll.u32 [#allocation3], 4
      %s20 = int_to_ptr.vmem [resolvable:$true] %s19
      %22 = dma.hbm_to_vmem [thread:$0]  %s1, 128, %s20, [#allocation4]
    $region9: #{tpu_custom_call.1} parent=1 // pred_fallthru
      _
    // Predicated region
    $region10: #{tpu_custom_call.1} parent=1 // pred_check
      _
    $region11: #{tpu_custom_call.1} parent=1 // pred_check_branch
      %24 = sbr.rel (0) target = $region13
    $region12: #{tpu_custom_call.1} parent=1 // pred_region
      _
    $region13: #{tpu_custom_call.1} parent=1 // pred_fallthru
      _
    // Predicated region
    $region14: #{tpu_custom_call.1} parent=1 // pred_check
      _
    $region15: #{tpu_custom_call.1} parent=1 // pred_check_branch
      %26 = sbr.rel (0) target = $region17
    $region16: #{tpu_custom_call.1} parent=1 // pred_region
      %27 = dma.done [#allocation4], 128
    $region17: #{tpu_custom_call.1} parent=1 // pred_fallthru
      _
    %v28 = vld [vmem:[%s2] sm:$0x1]
    %v29 = vld [vmem:[#allocation3] sm:$0xff]
    %s30 = sld [smem:[#allocation2]]
    %v31 = vstv %s30
    %vm32 = vcmask 261120
    %v34 = vsel %vm32, %v28, 0
    %v37 = vsel %vm32, %v29, 0
    %39 = vmatprep.subr.mxu0 0.0
    %40 = vmatpush1.xpose.msra.mxu0 0.0
    %41 = vmatprep.subr.mxu0 0.0
    %42 = vmatpush1.xpose.msra.mxu0 0.0
    %43 = vmatprep.subr.mxu0 0.0
    %44 = vmatpush1.xpose.msra.mxu0 0.0
    %45 = vmatprep.subr.mxu0 0.0
    %46 = vmatpush1.xpose.msra.mxu0 0.0
    %47 = vmatprep.subr.mxu0 0.0
    %48 = vmatpush1.xpose.msra.mxu0 0.0
    %49 = vmatprep.subr.mxu0 0.0
    %50 = vmatpush1.xpose.msra.mxu0 0.0
    %51 = vmatprep.subr.mxu0 0.0
    %52 = vmatpush1.xpose.msra.mxu0 0.0
    %53 = vmatprep.subr.mxu0 0.0
    %54 = vmatpush1.xpose.msra.mxu0 0.0
    %55 = vmatprep.subr.mxu0 0.0
    %56 = vmatpush1.xpose.msra.mxu0 0.0
    %57 = vmatprep.subr.mxu0 0.0
    %58 = vmatpush1.xpose.msra.mxu0 0.0
    %59 = vmatprep.subr.mxu0 0.0
    %60 = vmatpush1.xpose.msra.mxu0 0.0
    %61 = vmatprep.subr.mxu0 0.0
    %62 = vmatpush1.xpose.msra.mxu0 0.0
    %63 = vmatprep.subr.mxu0 0.0
    %64 = vmatpush1.xpose.msra.mxu0 0.0
    %65 = vmatprep.subr.mxu0 0.0
    %66 = vmatpush1.xpose.msra.mxu0 0.0
    %67 = vmatprep.subr.mxu0 0.0
    %68 = vmatpush1.xpose.msra.mxu0 0.0
    %69 = vmatprep.subr.mxu0 0.0
    %v70 = vand.u32 %v37, 4294901760
    %71 = vmatpush1.xpose.msra.mxu0 %v70
    %72 = vmatprep.subr.mxu0 0.0
    %73 = vmatpush2.xpose.msra.mxu0 0.0
    %74 = vmatprep.subr.mxu0 0.0
    %75 = vmatpush2.xpose.msra.mxu0 0.0
    %76 = vmatprep.subr.mxu0 0.0
    %77 = vmatpush2.xpose.msra.mxu0 0.0
    %78 = vmatprep.subr.mxu0 0.0
    %79 = vmatpush2.xpose.msra.mxu0 0.0
    %80 = vmatprep.subr.mxu0 0.0
    %81 = vmatpush2.xpose.msra.mxu0 0.0
    %82 = vmatprep.subr.mxu0 0.0
    %83 = vmatpush2.xpose.msra.mxu0 0.0
    %84 = vmatprep.subr.mxu0 0.0
    %85 = vmatpush2.xpose.msra.mxu0 0.0
    %86 = vmatprep.subr.mxu0 0.0
    %87 = vmatpush2.xpose.msra.mxu0 0.0
    %88 = vmatprep.subr.mxu0 0.0
    %89 = vmatpush2.xpose.msra.mxu0 0.0
    %90 = vmatprep.subr.mxu0 0.0
    %91 = vmatpush2.xpose.msra.mxu0 0.0
    %92 = vmatprep.subr.mxu0 0.0
    %93 = vmatpush2.xpose.msra.mxu0 0.0
    %94 = vmatprep.subr.mxu0 0.0
    %95 = vmatpush2.xpose.msra.mxu0 0.0
    %96 = vmatprep.subr.mxu0 0.0
    %97 = vmatpush2.xpose.msra.mxu0 0.0
    %98 = vmatprep.subr.mxu0 0.0
    %99 = vmatpush2.xpose.msra.mxu0 0.0
    %100 = vmatprep.subr.mxu0 0.0
    %101 = vmatpush2.xpose.msra.mxu0 0.0
    %102 = vmatprep.subr.mxu0 0.0
    %103 = vmatpush2.xpose.msra.mxu0 0.0
    %104 = vmatprep.mubr.f32.mxu0 0.0
    %v105 = vand.u32 %v34, 4294901760
    %v106 = vsub.f32 %v34, %v105
    %v107 = vand.u32 %v106, 4294901760
    %v108 = vsub.f32 %v106, %v107
    %v109 = vand.u32 %v108, 4294901760
    %110 = vmatmul.mubr.f32.gmra.mxu0 %v109
    %v111 = vpop.f32.mrf.mxu0
    %v112 = vadd.f32 %v31, %v111
    %v113 = vpop.f32.mrf.mxu0
    %114 = vdwg.mxu0
    %115 = vmatprep.subr.mxu0 0.0
    %116 = vmatpush1.xpose.msra.mxu0 0.0
    %117 = vmatprep.subr.mxu0 0.0
    %118 = vmatpush1.xpose.msra.mxu0 0.0
    %119 = vmatprep.subr.mxu0 0.0
    %120 = vmatpush1.xpose.msra.mxu0 0.0
    %121 = vmatprep.subr.mxu0 0.0
    %122 = vmatpush1.xpose.msra.mxu0 0.0
    %123 = vmatprep.subr.mxu0 0.0
    %124 = vmatpush1.xpose.msra.mxu0 0.0
    %125 = vmatprep.subr.mxu0 0.0
    %126 = vmatpush1.xpose.msra.mxu0 0.0
    %127 = vmatprep.subr.mxu0 0.0
    %128 = vmatpush1.xpose.msra.mxu0 0.0
    %129 = vmatprep.subr.mxu0 0.0
    %130 = vmatpush1.xpose.msra.mxu0 0.0
    %131 = vmatprep.subr.mxu0 0.0
    %132 = vmatpush1.xpose.msra.mxu0 0.0
    %133 = vmatprep.subr.mxu0 0.0
    %134 = vmatpush1.xpose.msra.mxu0 0.0
    %135 = vmatprep.subr.mxu0 0.0
    %136 = vmatpush1.xpose.msra.mxu0 0.0
    %137 = vmatprep.subr.mxu0 0.0
    %138 = vmatpush1.xpose.msra.mxu0 0.0
    %139 = vmatprep.subr.mxu0 0.0
    %140 = vmatpush1.xpose.msra.mxu0 0.0
    %141 = vmatprep.subr.mxu0 0.0
    %142 = vmatpush1.xpose.msra.mxu0 0.0
    %143 = vmatprep.subr.mxu0 0.0
    %144 = vmatpush1.xpose.msra.mxu0 0.0
    %145 = vmatprep.subr.mxu0 0.0
    %v146 = vand.u32 %v37, 4294901760
    %v147 = vsub.f32 %v37, %v146
    %v148 = vand.u32 %v147, 4294901760
    %v149 = vsub.f32 %v147, %v148
    %v150 = vand.u32 %v149, 4294901760
    %151 = vmatpush1.xpose.msra.mxu0 %v150
    %152 = vmatprep.subr.mxu0 0.0
    %153 = vmatpush2.xpose.msra.mxu0 0.0
    %154 = vmatprep.subr.mxu0 0.0
    %155 = vmatpush2.xpose.msra.mxu0 0.0
    %156 = vmatprep.subr.mxu0 0.0
    %157 = vmatpush2.xpose.msra.mxu0 0.0
    %158 = vmatprep.subr.mxu0 0.0
    %159 = vmatpush2.xpose.msra.mxu0 0.0
    %160 = vmatprep.subr.mxu0 0.0
    %161 = vmatpush2.xpose.msra.mxu0 0.0
    %162 = vmatprep.subr.mxu0 0.0
    %163 = vmatpush2.xpose.msra.mxu0 0.0
    %164 = vmatprep.subr.mxu0 0.0
    %165 = vmatpush2.xpose.msra.mxu0 0.0
    %166 = vmatprep.subr.mxu0 0.0
    %167 = vmatpush2.xpose.msra.mxu0 0.0
    %168 = vmatprep.subr.mxu0 0.0
    %169 = vmatpush2.xpose.msra.mxu0 0.0
    %170 = vmatprep.subr.mxu0 0.0
    %171 = vmatpush2.xpose.msra.mxu0 0.0
    %172 = vmatprep.subr.mxu0 0.0
    %173 = vmatpush2.xpose.msra.mxu0 0.0
    %174 = vmatprep.subr.mxu0 0.0
    %175 = vmatpush2.xpose.msra.mxu0 0.0
    %176 = vmatprep.subr.mxu0 0.0
    %177 = vmatpush2.xpose.msra.mxu0 0.0
    %178 = vmatprep.subr.mxu0 0.0
    %179 = vmatpush2.xpose.msra.mxu0 0.0
    %180 = vmatprep.subr.mxu0 0.0
    %181 = vmatpush2.xpose.msra.mxu0 0.0
    %182 = vmatprep.subr.mxu0 0.0
    %183 = vmatpush2.xpose.msra.mxu0 0.0
    %184 = vmatprep.mubr.f32.mxu0 0.0
    %v185 = vand.u32 %v34, 4294901760
    %186 = vmatmul.mubr.f32.gmra.mxu0 %v185
    %v187 = vpop.f32.mrf.mxu0
    %v188 = vadd.f32 %v112, %v187
    %v189 = vpop.f32.mrf.mxu0
    %190 = vdwg.mxu0
    %191 = vmatprep.subr.mxu0 0.0
    %192 = vmatpush1.xpose.msra.mxu0 0.0
    %193 = vmatprep.subr.mxu0 0.0
    %194 = vmatpush1.xpose.msra.mxu0 0.0
    %195 = vmatprep.subr.mxu0 0.0
    %196 = vmatpush1.xpose.msra.mxu0 0.0
    %197 = vmatprep.subr.mxu0 0.0
    %198 = vmatpush1.xpose.msra.mxu0 0.0
    %199 = vmatprep.subr.mxu0 0.0
    %200 = vmatpush1.xpose.msra.mxu0 0.0
    %201 = vmatprep.subr.mxu0 0.0
    %202 = vmatpush1.xpose.msra.mxu0 0.0
    %203 = vmatprep.subr.mxu0 0.0
    %204 = vmatpush1.xpose.msra.mxu0 0.0
    %205 = vmatprep.subr.mxu0 0.0
    %206 = vmatpush1.xpose.msra.mxu0 0.0
    %207 = vmatprep.subr.mxu0 0.0
    %208 = vmatpush1.xpose.msra.mxu0 0.0
    %209 = vmatprep.subr.mxu0 0.0
    %210 = vmatpush1.xpose.msra.mxu0 0.0
    %211 = vmatprep.subr.mxu0 0.0
    %212 = vmatpush1.xpose.msra.mxu0 0.0
    %213 = vmatprep.subr.mxu0 0.0
    %214 = vmatpush1.xpose.msra.mxu0 0.0
    %215 = vmatprep.subr.mxu0 0.0
    %216 = vmatpush1.xpose.msra.mxu0 0.0
    %217 = vmatprep.subr.mxu0 0.0
    %218 = vmatpush1.xpose.msra.mxu0 0.0
    %219 = vmatprep.subr.mxu0 0.0
    %220 = vmatpush1.xpose.msra.mxu0 0.0
    %221 = vmatprep.subr.mxu0 0.0
    %v222 = vand.u32 %v37, 4294901760
    %v223 = vsub.f32 %v37, %v222
    %224 = vmatpush1.xpose.msra.mxu0 %v223
    %225 = vmatprep.subr.mxu0 0.0
    %226 = vmatpush2.xpose.msra.mxu0 0.0
    %227 = vmatprep.subr.mxu0 0.0
    %228 = vmatpush2.xpose.msra.mxu0 0.0
    %229 = vmatprep.subr.mxu0 0.0
    %230 = vmatpush2.xpose.msra.mxu0 0.0
    %231 = vmatprep.subr.mxu0 0.0
    %232 = vmatpush2.xpose.msra.mxu0 0.0
    %233 = vmatprep.subr.mxu0 0.0
    %234 = vmatpush2.xpose.msra.mxu0 0.0
    %235 = vmatprep.subr.mxu0 0.0
    %236 = vmatpush2.xpose.msra.mxu0 0.0
    %237 = vmatprep.subr.mxu0 0.0
    %238 = vmatpush2.xpose.msra.mxu0 0.0
    %239 = vmatprep.subr.mxu0 0.0
    %240 = vmatpush2.xpose.msra.mxu0 0.0
    %241 = vmatprep.subr.mxu0 0.0
    %242 = vmatpush2.xpose.msra.mxu0 0.0
    %243 = vmatprep.subr.mxu0 0.0
    %244 = vmatpush2.xpose.msra.mxu0 0.0
    %245 = vmatprep.subr.mxu0 0.0
    %246 = vmatpush2.xpose.msra.mxu0 0.0
    %247 = vmatprep.subr.mxu0 0.0
    %248 = vmatpush2.xpose.msra.mxu0 0.0
    %249 = vmatprep.subr.mxu0 0.0
    %250 = vmatpush2.xpose.msra.mxu0 0.0
    %251 = vmatprep.subr.mxu0 0.0
    %252 = vmatpush2.xpose.msra.mxu0 0.0
    %253 = vmatprep.subr.mxu0 0.0
    %254 = vmatpush2.xpose.msra.mxu0 0.0
    %255 = vmatprep.subr.mxu0 0.0
    %256 = vmatpush2.xpose.msra.mxu0 0.0
    %257 = vmatprep.mubr.f32.mxu0 0.0
    %v258 = vand.u32 %v34, 4294901760
    %v259 = vsub.f32 %v34, %v258
    %260 = vmatmul.mubr.f32.gmra.mxu0 %v259
    %v261 = vpop.f32.mrf.mxu0
    %v262 = vadd.f32 %v188, %v261
    %v263 = vpop.f32.mrf.mxu0
    %264 = vdwg.mxu0
    %265 = vmatprep.subr.mxu0 0.0
    %266 = vmatpush1.xpose.msra.mxu0 0.0
    %267 = vmatprep.subr.mxu0 0.0
    %268 = vmatpush1.xpose.msra.mxu0 0.0
    %269 = vmatprep.subr.mxu0 0.0
    %270 = vmatpush1.xpose.msra.mxu0 0.0
    %271 = vmatprep.subr.mxu0 0.0
    %272 = vmatpush1.xpose.msra.mxu0 0.0
    %273 = vmatprep.subr.mxu0 0.0
    %274 = vmatpush1.xpose.msra.mxu0 0.0
    %275 = vmatprep.subr.mxu0 0.0
    %276 = vmatpush1.xpose.msra.mxu0 0.0
    %277 = vmatprep.subr.mxu0 0.0
    %278 = vmatpush1.xpose.msra.mxu0 0.0
    %279 = vmatprep.subr.mxu0 0.0
    %280 = vmatpush1.xpose.msra.mxu0 0.0
    %281 = vmatprep.subr.mxu0 0.0
    %282 = vmatpush1.xpose.msra.mxu0 0.0
    %283 = vmatprep.subr.mxu0 0.0
    %284 = vmatpush1.xpose.msra.mxu0 0.0
    %285 = vmatprep.subr.mxu0 0.0
    %286 = vmatpush1.xpose.msra.mxu0 0.0
    %287 = vmatprep.subr.mxu0 0.0
    %288 = vmatpush1.xpose.msra.mxu0 0.0
    %289 = vmatprep.subr.mxu0 0.0
    %290 = vmatpush1.xpose.msra.mxu0 0.0
    %291 = vmatprep.subr.mxu0 0.0
    %292 = vmatpush1.xpose.msra.mxu0 0.0
    %293 = vmatprep.subr.mxu0 0.0
    %294 = vmatpush1.xpose.msra.mxu0 0.0
    %295 = vmatprep.subr.mxu0 0.0
    %v296 = vand.u32 %v37, 4294901760
    %297 = vmatpush1.xpose.msra.mxu0 %v296
    %298 = vmatprep.subr.mxu0 0.0
    %299 = vmatpush2.xpose.msra.mxu0 0.0
    %300 = vmatprep.subr.mxu0 0.0
    %301 = vmatpush2.xpose.msra.mxu0 0.0
    %302 = vmatprep.subr.mxu0 0.0
    %303 = vmatpush2.xpose.msra.mxu0 0.0
    %304 = vmatprep.subr.mxu0 0.0
    %305 = vmatpush2.xpose.msra.mxu0 0.0
    %306 = vmatprep.subr.mxu0 0.0
    %307 = vmatpush2.xpose.msra.mxu0 0.0
    %308 = vmatprep.subr.mxu0 0.0
    %309 = vmatpush2.xpose.msra.mxu0 0.0
    %310 = vmatprep.subr.mxu0 0.0
    %311 = vmatpush2.xpose.msra.mxu0 0.0
    %312 = vmatprep.subr.mxu0 0.0
    %313 = vmatpush2.xpose.msra.mxu0 0.0
    %314 = vmatprep.subr.mxu0 0.0
    %315 = vmatpush2.xpose.msra.mxu0 0.0
    %316 = vmatprep.subr.mxu0 0.0
    %317 = vmatpush2.xpose.msra.mxu0 0.0
    %318 = vmatprep.subr.mxu0 0.0
    %319 = vmatpush2.xpose.msra.mxu0 0.0
    %320 = vmatprep.subr.mxu0 0.0
    %321 = vmatpush2.xpose.msra.mxu0 0.0
    %322 = vmatprep.subr.mxu0 0.0
    %323 = vmatpush2.xpose.msra.mxu0 0.0
    %324 = vmatprep.subr.mxu0 0.0
    %325 = vmatpush2.xpose.msra.mxu0 0.0
    %326 = vmatprep.subr.mxu0 0.0
    %327 = vmatpush2.xpose.msra.mxu0 0.0
    %328 = vmatprep.subr.mxu0 0.0
    %329 = vmatpush2.xpose.msra.mxu0 0.0
    %330 = vmatprep.mubr.f32.mxu0 0.0
    %v331 = vand.u32 %v34, 4294901760
    %v332 = vsub.f32 %v34, %v331
    %v333 = vand.u32 %v332, 4294901760
    %334 = vmatmul.mubr.f32.gmra.mxu0 %v333
    %v335 = vpop.f32.mrf.mxu0
    %v336 = vadd.f32 %v262, %v335
    %v337 = vpop.f32.mrf.mxu0
    %338 = vdwg.mxu0
    %339 = vmatprep.subr.mxu0 0.0
    %340 = vmatpush1.xpose.msra.mxu0 0.0
    %341 = vmatprep.subr.mxu0 0.0
    %342 = vmatpush1.xpose.msra.mxu0 0.0
    %343 = vmatprep.subr.mxu0 0.0
    %344 = vmatpush1.xpose.msra.mxu0 0.0
    %345 = vmatprep.subr.mxu0 0.0
    %346 = vmatpush1.xpose.msra.mxu0 0.0
    %347 = vmatprep.subr.mxu0 0.0
    %348 = vmatpush1.xpose.msra.mxu0 0.0
    %349 = vmatprep.subr.mxu0 0.0
    %350 = vmatpush1.xpose.msra.mxu0 0.0
    %351 = vmatprep.subr.mxu0 0.0
    %352 = vmatpush1.xpose.msra.mxu0 0.0
    %353 = vmatprep.subr.mxu0 0.0
    %354 = vmatpush1.xpose.msra.mxu0 0.0
    %355 = vmatprep.subr.mxu0 0.0
    %356 = vmatpush1.xpose.msra.mxu0 0.0
    %357 = vmatprep.subr.mxu0 0.0
    %358 = vmatpush1.xpose.msra.mxu0 0.0
    %359 = vmatprep.subr.mxu0 0.0
    %360 = vmatpush1.xpose.msra.mxu0 0.0
    %361 = vmatprep.subr.mxu0 0.0
    %362 = vmatpush1.xpose.msra.mxu0 0.0
    %363 = vmatprep.subr.mxu0 0.0
    %364 = vmatpush1.xpose.msra.mxu0 0.0
    %365 = vmatprep.subr.mxu0 0.0
    %366 = vmatpush1.xpose.msra.mxu0 0.0
    %367 = vmatprep.subr.mxu0 0.0
    %368 = vmatpush1.xpose.msra.mxu0 0.0
    %369 = vmatprep.subr.mxu0 0.0
    %v370 = vand.u32 %v37, 4294901760
    %v371 = vsub.f32 %v37, %v370
    %v372 = vand.u32 %v371, 4294901760
    %373 = vmatpush1.xpose.msra.mxu0 %v372
    %374 = vmatprep.subr.mxu0 0.0
    %375 = vmatpush2.xpose.msra.mxu0 0.0
    %376 = vmatprep.subr.mxu0 0.0
    %377 = vmatpush2.xpose.msra.mxu0 0.0
    %378 = vmatprep.subr.mxu0 0.0
    %379 = vmatpush2.xpose.msra.mxu0 0.0
    %380 = vmatprep.subr.mxu0 0.0
    %381 = vmatpush2.xpose.msra.mxu0 0.0
    %382 = vmatprep.subr.mxu0 0.0
    %383 = vmatpush2.xpose.msra.mxu0 0.0
    %384 = vmatprep.subr.mxu0 0.0
    %385 = vmatpush2.xpose.msra.mxu0 0.0
    %386 = vmatprep.subr.mxu0 0.0
    %387 = vmatpush2.xpose.msra.mxu0 0.0
    %388 = vmatprep.subr.mxu0 0.0
    %389 = vmatpush2.xpose.msra.mxu0 0.0
    %390 = vmatprep.subr.mxu0 0.0
    %391 = vmatpush2.xpose.msra.mxu0 0.0
    %392 = vmatprep.subr.mxu0 0.0
    %393 = vmatpush2.xpose.msra.mxu0 0.0
    %394 = vmatprep.subr.mxu0 0.0
    %395 = vmatpush2.xpose.msra.mxu0 0.0
    %396 = vmatprep.subr.mxu0 0.0
    %397 = vmatpush2.xpose.msra.mxu0 0.0
    %398 = vmatprep.subr.mxu0 0.0
    %399 = vmatpush2.xpose.msra.mxu0 0.0
    %400 = vmatprep.subr.mxu0 0.0
    %401 = vmatpush2.xpose.msra.mxu0 0.0
    %402 = vmatprep.subr.mxu0 0.0
    %403 = vmatpush2.xpose.msra.mxu0 0.0
    %404 = vmatprep.subr.mxu0 0.0
    %405 = vmatpush2.xpose.msra.mxu0 0.0
    %406 = vmatprep.mubr.f32.mxu0 0.0
    %v407 = vand.u32 %v34, 4294901760
    %408 = vmatmul.mubr.f32.gmra.mxu0 %v407
    %v409 = vpop.f32.mrf.mxu0
    %v410 = vadd.f32 %v336, %v409
    %v411 = vpop.f32.mrf.mxu0
    %412 = vdwg.mxu0
    %413 = vmatprep.subr.mxu0 0.0
    %414 = vmatpush1.xpose.msra.mxu0 0.0
    %415 = vmatprep.subr.mxu0 0.0
    %416 = vmatpush1.xpose.msra.mxu0 0.0
    %417 = vmatprep.subr.mxu0 0.0
    %418 = vmatpush1.xpose.msra.mxu0 0.0
    %419 = vmatprep.subr.mxu0 0.0
    %420 = vmatpush1.xpose.msra.mxu0 0.0
    %421 = vmatprep.subr.mxu0 0.0
    %422 = vmatpush1.xpose.msra.mxu0 0.0
    %423 = vmatprep.subr.mxu0 0.0
    %424 = vmatpush1.xpose.msra.mxu0 0.0
    %425 = vmatprep.subr.mxu0 0.0
    %426 = vmatpush1.xpose.msra.mxu0 0.0
    %427 = vmatprep.subr.mxu0 0.0
    %428 = vmatpush1.xpose.msra.mxu0 0.0
    %429 = vmatprep.subr.mxu0 0.0
    %430 = vmatpush1.xpose.msra.mxu0 0.0
    %431 = vmatprep.subr.mxu0 0.0
    %432 = vmatpush1.xpose.msra.mxu0 0.0
    %433 = vmatprep.subr.mxu0 0.0
    %434 = vmatpush1.xpose.msra.mxu0 0.0
    %435 = vmatprep.subr.mxu0 0.0
    %436 = vmatpush1.xpose.msra.mxu0 0.0
    %437 = vmatprep.subr.mxu0 0.0
    %438 = vmatpush1.xpose.msra.mxu0 0.0
    %439 = vmatprep.subr.mxu0 0.0
    %440 = vmatpush1.xpose.msra.mxu0 0.0
    %441 = vmatprep.subr.mxu0 0.0
    %442 = vmatpush1.xpose.msra.mxu0 0.0
    %443 = vmatprep.subr.mxu0 0.0
    %v444 = vand.u32 %v37, 4294901760
    %445 = vmatpush1.xpose.msra.mxu0 %v444
    %446 = vmatprep.subr.mxu0 0.0
    %447 = vmatpush2.xpose.msra.mxu0 0.0
    %448 = vmatprep.subr.mxu0 0.0
    %449 = vmatpush2.xpose.msra.mxu0 0.0
    %450 = vmatprep.subr.mxu0 0.0
    %451 = vmatpush2.xpose.msra.mxu0 0.0
    %452 = vmatprep.subr.mxu0 0.0
    %453 = vmatpush2.xpose.msra.mxu0 0.0
    %454 = vmatprep.subr.mxu0 0.0
    %455 = vmatpush2.xpose.msra.mxu0 0.0
    %456 = vmatprep.subr.mxu0 0.0
    %457 = vmatpush2.xpose.msra.mxu0 0.0
    %458 = vmatprep.subr.mxu0 0.0
    %459 = vmatpush2.xpose.msra.mxu0 0.0
    %460 = vmatprep.subr.mxu0 0.0
    %461 = vmatpush2.xpose.msra.mxu0 0.0
    %462 = vmatprep.subr.mxu0 0.0
    %463 = vmatpush2.xpose.msra.mxu0 0.0
    %464 = vmatprep.subr.mxu0 0.0
    %465 = vmatpush2.xpose.msra.mxu0 0.0
    %466 = vmatprep.subr.mxu0 0.0
    %467 = vmatpush2.xpose.msra.mxu0 0.0
    %468 = vmatprep.subr.mxu0 0.0
    %469 = vmatpush2.xpose.msra.mxu0 0.0
    %470 = vmatprep.subr.mxu0 0.0
    %471 = vmatpush2.xpose.msra.mxu0 0.0
    %472 = vmatprep.subr.mxu0 0.0
    %473 = vmatpush2.xpose.msra.mxu0 0.0
    %474 = vmatprep.subr.mxu0 0.0
    %475 = vmatpush2.xpose.msra.mxu0 0.0
    %476 = vmatprep.subr.mxu0 0.0
    %477 = vmatpush2.xpose.msra.mxu0 0.0
    %478 = vmatprep.mubr.f32.mxu0 0.0
    %v479 = vand.u32 %v34, 4294901760
    %480 = vmatmul.mubr.f32.gmra.mxu0 %v479
    %v481 = vpop.f32.mrf.mxu0
    %v482 = vadd.f32 %v410, %v481
    %v483 = vpop.f32.mrf.mxu0
    %484 = vdwg.mxu0
    %vm485 = vcmask 57344
    %486 = vst.msk [vmem:[#allocation6] sm:$0x1] %vm485, %v482
    // Predicated region
    $region18: #{tpu_custom_call.1} parent=1 // pred_check
      _
    $region19: #{tpu_custom_call.1} parent=1 // pred_check_branch
      %488 = sbr.rel (0) target = $region21
    $region20: #{tpu_custom_call.1} parent=1 // pred_region
      %s490 = ssub.s32 16, 16
      %491 = vsyncadd [#allocation5], %s490
      %s493 = sshll.u32 [#allocation6], 4
      %s494 = int_to_ptr.vmem [resolvable:$true] %s493
      %496 = dma.vmem_to_hbm [thread:$0]  %s494, 16, %s3, [#allocation5]
    $region21: #{tpu_custom_call.1} parent=1 // pred_fallthru
      _
    // Predicated region
    $region22: #{tpu_custom_call.1} parent=1 // pred_check
      _
    $region23: #{tpu_custom_call.1} parent=1 // pred_check_branch
      %498 = sbr.rel (0) target = $region25
    $region24: #{tpu_custom_call.1} parent=1 // pred_region
      %499 = dma.done [#allocation5], 16
    $region25: #{tpu_custom_call.1} parent=1 // pred_fallthru
      _
    %500 = vsyncpa [#allocation4], 1
    %501 = vsyncpa [#allocation5], 1

</llo_original>
